<compile_context>
chip_gen: v6e
topology: v6e:2x2x1
jax: 0.10.0
libtpu: 0.0.40
codegen_flags: <defaults>
</compile_context>

<pallas_src>
import jax
import jax.numpy as jnp
from jax.experimental import pallas as pl
from jax.experimental.pallas import tpu as pltpu


# ----------------------------- hyper-parameters ------------------------------
H_DIM = 32              # h_dim (small stand-in for the original 200)
IN_DIM = H_DIM * 2      # 64   (two concatenated embeddings)
HID = H_DIM * 8         # 256  (fn1/fn2/fn3 width)
OUT_DIM = 200           # fn4 output dim (hard-coded to 200 in the PyTorch module)
OUT_PAD = 256           # lane-dense padding of the output dim (200 -> 256)
N_VOCAB = 64
BATCH = 8
LN_EPS = 1e-5           # nn.LayerNorm default

# rows of the packed (16, OUT_PAD) per-feature-vector table
_B1, _G1, _BE1 = 0, 1, 2
_B2, _G2, _BE2 = 3, 4, 5
_B3, _G3, _BE3 = 6, 7, 8
_B4 = 9


# ------------------------------ Pallas kernel --------------------------------
def _oreo_kernel(ids_ref, emb_ref, w1_ref, w2_ref, w3_ref, w4_ref,
                 vecs_ref, tgt_ref, pred_ref, loss_ref):
    B = ids_ref.shape[0]
    V, H = emb_ref.shape

    def row(i):                              # static row of the packed vector table
        return vecs_ref[i:i + 1, :]          # (1, OUT_PAD) f32

    def layer_norm(x, gamma, beta):
        # one-pass stats: mu = E[x], var = E[x^2] - mu^2 (biased, as nn.LayerNorm)
        n_inv = 1.0 / x.shape[-1]
        s1 = jnp.sum(x, axis=-1, keepdims=True)
        s2 = jnp.sum(x * x, axis=-1, keepdims=True)
        mu = s1 * n_inv
        var = s2 * n_inv - mu * mu
        return (x - mu) * jax.lax.rsqrt(var + LN_EPS) * gamma + beta

    def dot_bf16(x, w_bf16):                 # bf16 MXU matmul, f32 accumulate
        return jnp.dot(x.astype(jnp.bfloat16), w_bf16,
                       preferred_element_type=jnp.float32)

    # ---- fused embedding gather: one-hot (B, V) @ emb (V, H) on the MXU ------
    ids = ids_ref[...]                                            # (B, 2) int32
    iota_v = jax.lax.broadcasted_iota(jnp.int32, (B, V), 1)
    emb = emb_ref[...]                                            # (V, H) f32
    z0 = jnp.dot((iota_v == ids[:, 0:1]).astype(jnp.float32), emb,
                 preferred_element_type=jnp.float32)              # (B, H)
    z1 = jnp.dot((iota_v == ids[:, 1:2]).astype(jnp.float32), emb,
                 preferred_element_type=jnp.float32)              # (B, H)

    # ---- fn1 / norm1 / tanh :  z @ W1  ==  z0 @ W1[:H] + z1 @ W1[H:] ---------
    w1 = w1_ref[...]                                              # (2H, HID) bf16
    h = dot_bf16(z0, w1[:H, :]) + dot_bf16(z1, w1[H:, :]) + row(_B1)
    h = jnp.tanh(layer_norm(h, row(_G1), row(_BE1)))

    # ---- fn2 / norm2 / tanh --------------------------------------------------
    h = dot_bf16(h, w2_ref[...]) + row(_B2)
    h = jnp.tanh(layer_norm(h, row(_G2), row(_BE2)))

    # ---- fn3 / norm3 / tanh --------------------------------------------------
    h = dot_bf16(h, w3_ref[...]) + row(_B3)
    h = jnp.tanh(layer_norm(h, row(_G3), row(_BE3)))

    # drop1: nn.Dropout is identity in eval mode (inference semantics).
    # TODO(synk): training-mode dropout (pltpu.prng_random_bits mask) not emitted.

    # ---- fn4 (output padded 200 -> 256; pad columns are exactly zero) --------
    o = dot_bf16(h, w4_ref[...]) + row(_B4)                       # (B, OUT_PAD)
    pred_ref[...] = o                                             # lane-dense store

    # ---- MSELoss(mean) over the real 200 columns -----------------------------
    # w4/b4/target pad columns are zero, so padded diff columns are exactly 0.
    diff = o - tgt_ref[...]
    sse = jnp.sum(diff * diff, keepdims=True)                     # (1, 1)
    loss_ref[...] = sse * (1.0 / (B * OUT_DIM))


# ------------------------------- wrapper --------------------------------------
def _cost_estimate(B):
    flops = 2 * B * (2 * N_VOCAB * H_DIM        # one-hot gather matmuls
                     + IN_DIM * HID             # fn1
                     + 2 * HID * HID            # fn2, fn3
                     + HID * OUT_PAD)           # fn4
    transcendentals = 3 * B * HID               # tanh x3 (rsqrt is negligible)
    bytes_w = 2 * (IN_DIM * HID + 2 * HID * HID + HID * OUT_PAD)   # bf16 weights
    bytes_misc = (B * 2 * 4 + N_VOCAB * H_DIM * 4 + 16 * OUT_PAD * 4
                  + 2 * B * OUT_PAD * 4 + 4)
    return pl.CostEstimate(flops=flops, transcendentals=transcendentals,
                           bytes_accessed=bytes_w + bytes_misc)


@jax.jit
def convmorph_oreo_forward(input_ids, target, params):
    """input_ids: (B, 2) int32 token ids; target: (B, OUT_DIM) f32."""
    B = input_ids.shape[0]
    tgt_pad = jnp.zeros((B, OUT_PAD), jnp.float32).at[:, :OUT_DIM].set(target)

    vmem = pl.BlockSpec(memory_space=pltpu.MemorySpace.VMEM)

    pred_pad, loss = pl.pallas_call(
        _oreo_kernel,
        out_shape=(
            jax.ShapeDtypeStruct((B, OUT_PAD), jnp.float32),   # pred (padded)
            jax.ShapeDtypeStruct((1, 1), jnp.float32),         # loss
        ),
        in_specs=[vmem] * 8,
        out_specs=(vmem, vmem),
        cost_estimate=_cost_estimate(B),
    )(
        input_ids, params["emb"],
        params["w1"], params["w2"], params["w3"], params["w4"],
        params["vecs"], tgt_pad,
    )
    return loss[0, 0], pred_pad[:, :OUT_DIM]


# --------------------------- deterministic init --------------------------------
def init_params(key):
    ks = jax.random.split(key, 9)

    def linear(kw, kb, fan_in, fan_out):
        # torch.nn.Linear default init: U(-1/sqrt(fan_in), 1/sqrt(fan_in))
        bound = 1.0 / float(jnp.sqrt(float(fan_in)))
        w = jax.random.uniform(kw, (fan_in, fan_out), jnp.float32, -bound, bound)
        b = jax.random.uniform(kb, (1, fan_out), jnp.float32, -bound, bound)
        return w, b

    emb = jax.random.normal(ks[0], (N_VOCAB, H_DIM), jnp.float32)  # nn.Embedding ~ N(0,1)
    w1, b1 = linear(ks[1], ks[2], IN_DIM, HID)
    w2, b2 = linear(ks[3], ks[4], HID, HID)
    w3, b3 = linear(ks[5], ks[6], HID, HID)
    w4, b4 = linear(ks[7], ks[8], HID, OUT_DIM)

    ones = jnp.ones((1, HID), jnp.float32)
    zeros = jnp.zeros((1, HID), jnp.float32)

    # pad fn4 to a lane-dense 256-wide output; extra columns are exactly zero
    w4_pad = jnp.zeros((HID, OUT_PAD), jnp.float32).at[:, :OUT_DIM].set(w4)
    b4_pad = jnp.zeros((1, OUT_PAD), jnp.float32).at[:, :OUT_DIM].set(b4)

    def pad256(v):
        return jnp.zeros((1, OUT_PAD), jnp.float32).at[:, :v.shape[1]].set(v)

    rows = [b1, ones, zeros,       # fn1 bias, norm1 gamma/beta
            b2, ones, zeros,       # fn2 bias, norm2 gamma/beta
            b3, ones, zeros,       # fn3 bias, norm3 gamma/beta
            b4_pad]                # fn4 bias (padded)
    vecs = jnp.zeros((16, OUT_PAD), jnp.float32)
    for i, v in enumerate(rows):
        vecs = vecs.at[i:i + 1, :].set(pad256(v))

    return dict(
        emb=emb,                                   # (V, H) f32
        w1=w1.astype(jnp.bfloat16),                # (2H, HID)  bf16
        w2=w2.astype(jnp.bfloat16),                # (HID, HID) bf16
        w3=w3.astype(jnp.bfloat16),                # (HID, HID) bf16
        w4=w4_pad.astype(jnp.bfloat16),            # (HID, OUT_PAD) bf16, zero-padded
        vecs=vecs,                                 # (16, OUT_PAD) f32 packed vectors
    )


# --------------------------- pure-JAX reference --------------------------------
def forward_reference(input_ids, target, params):
    vecs = params["vecs"]
    row = lambda i: vecs[i:i + 1, :HID]

    def dot_bf16(x, w_bf16):
        return jnp.dot(x.astype(jnp.bfloat16), w_bf16,
                       preferred_element_type=jnp.float32)

    def ln(x, g, b):
        mu = jnp.mean(x, -1, keepdims=True)
        var = jnp.mean(jnp.square(x - mu), -1, keepdims=True)
        return (x - mu) * jax.lax.rsqrt(var + LN_EPS) * g + b

    z = params["emb"][input_ids].reshape(-1, IN_DIM)
    h = jnp.tanh(ln(dot_bf16(z, params["w1"]) + row(_B1), row(_G1), row(_BE1)))
    h = jnp.tanh(ln(dot_bf16(h, params["w2"]) + row(_B2), row(_G2), row(_BE2)))
    h = jnp.tanh(ln(dot_bf16(h, params["w3"]) + row(_B3), row(_G3), row(_BE3)))
    o = (dot_bf16(h, params["w4"]) + vecs[_B4:_B4 + 1, :])[:, :OUT_DIM]
    loss = jnp.mean(jnp.square(o - target))
    return loss, o


# ----------------------------------- main ---------------------------------------
if __name__ == "__main__":
    key = jax.random.PRNGKey(0)
    k_param, k_ids, k_tgt = jax.random.split(key, 3)

    params = init_params(k_param)
    input_ids = jax.random.randint(k_ids, (BATCH, 2), 0, N_VOCAB, dtype=jnp.int32)
    target = jax.random.normal(k_tgt, (BATCH, OUT_DIM), jnp.float32)

    loss, pred_vec = convmorph_oreo_forward(input_ids, target, params)
    jax.block_until_ready((loss, pred_vec))

    assert pred_vec.shape == (BATCH, OUT_DIM)
    assert loss.shape == ()

    ref_loss, ref_pred = forward_reference(input_ids, target, params)
    assert jnp.allclose(pred_vec, ref_pred, atol=1e-2, rtol=1e-2)
    assert jnp.allclose(loss, ref_loss, atol=1e-2, rtol=1e-2)

    print("KERNEL_OK")
</pallas_src>

<mosaic_0001>
module attributes {stable_mosaic.version = 11 : i64} {
  func.func @_oreo_kernel(%arg0: memref<8x2xi32, #tpu.memory_space<vmem>>, %arg1: memref<64x32xf32, #tpu.memory_space<vmem>>, %arg2: memref<64x256xbf16, #tpu.memory_space<vmem>>, %arg3: memref<256x256xbf16, #tpu.memory_space<vmem>>, %arg4: memref<256x256xbf16, #tpu.memory_space<vmem>>, %arg5: memref<256x256xbf16, #tpu.memory_space<vmem>>, %arg6: memref<16x256xf32, #tpu.memory_space<vmem>>, %arg7: memref<8x256xf32, #tpu.memory_space<vmem>>, %arg8: memref<8x256xf32, #tpu.memory_space<vmem>>, %arg9: memref<1x1xf32, #tpu.memory_space<vmem>>) attributes {dimension_semantics = [], scalar_prefetch = 0 : i64, scratch_operands = 0 : i64, tpu.core_type = #tpu.core_type<tc>} {
    %c0 = arith.constant 0 : index
    %c0_0 = arith.constant 0 : index
    %0 = vector.load %arg0[%c0, %c0_0] : memref<8x2xi32, #tpu.memory_space<vmem>>, vector<8x2xi32>
    %1 = tpu.iota {dimensions = array<i32: 1>} : vector<8x64xi32>
    %c0_1 = arith.constant 0 : index
    %c0_2 = arith.constant 0 : index
    %2 = vector.load %arg1[%c0_1, %c0_2] : memref<64x32xf32, #tpu.memory_space<vmem>>, vector<64x32xf32>
    %3 = vector.extract_strided_slice %0 {offsets = [0, 0], sizes = [8, 1], strides = [1, 1]} : vector<8x2xi32> to vector<8x1xi32>
    %4 = vector.broadcast %3 : vector<8x1xi32> to vector<8x64xi32>
    %5 = arith.cmpi eq, %1, %4 : vector<8x64xi32>
    %6 = arith.extui %5 : vector<8x64xi1> to vector<8x64xi32>
    %7 = arith.sitofp %6 : vector<8x64xi32> to vector<8x64xf32>
    %cst = arith.constant dense<0.000000e+00> : vector<8x32xf32>
    %8 = tpu.matmul %7, %2, %cst {dimension_numbers = #tpu.dot_dimension_numbers<[1], [0], [0], [1], [0, 0, 1, 1], [], []>} : vector<8x64xf32>, vector<64x32xf32>, vector<8x32xf32> -> vector<8x32xf32>
    %9 = vector.extract_strided_slice %0 {offsets = [0, 1], sizes = [8, 1], strides = [1, 1]} : vector<8x2xi32> to vector<8x1xi32>
    %10 = vector.broadcast %9 : vector<8x1xi32> to vector<8x64xi32>
    %11 = arith.cmpi eq, %1, %10 : vector<8x64xi32>
    %12 = arith.extui %11 : vector<8x64xi1> to vector<8x64xi32>
    %13 = arith.sitofp %12 : vector<8x64xi32> to vector<8x64xf32>
    %cst_3 = arith.constant dense<0.000000e+00> : vector<8x32xf32>
    %14 = tpu.matmul %13, %2, %cst_3 {dimension_numbers = #tpu.dot_dimension_numbers<[1], [0], [0], [1], [0, 0, 1, 1], [], []>} : vector<8x64xf32>, vector<64x32xf32>, vector<8x32xf32> -> vector<8x32xf32>
    %c0_4 = arith.constant 0 : index
    %c0_5 = arith.constant 0 : index
    %15 = vector.load %arg2[%c0_4, %c0_5] : memref<64x256xbf16, #tpu.memory_space<vmem>>, vector<64x256xbf16>
    %16 = vector.extract_strided_slice %15 {offsets = [0, 0], sizes = [32, 256], strides = [1, 1]} : vector<64x256xbf16> to vector<32x256xbf16>
    %17 = arith.truncf %8 : vector<8x32xf32> to vector<8x32xbf16>
    %cst_6 = arith.constant dense<0.000000e+00> : vector<8x256xf32>
    %18 = tpu.matmul %17, %16, %cst_6 {dimension_numbers = #tpu.dot_dimension_numbers<[1], [0], [0], [1], [0, 0, 1, 1], [], []>} : vector<8x32xbf16>, vector<32x256xbf16>, vector<8x256xf32> -> vector<8x256xf32>
    %19 = vector.extract_strided_slice %15 {offsets = [32, 0], sizes = [32, 256], strides = [1, 1]} : vector<64x256xbf16> to vector<32x256xbf16>
    %20 = arith.truncf %14 : vector<8x32xf32> to vector<8x32xbf16>
    %cst_7 = arith.constant dense<0.000000e+00> : vector<8x256xf32>
    %21 = tpu.matmul %20, %19, %cst_7 {dimension_numbers = #tpu.dot_dimension_numbers<[1], [0], [0], [1], [0, 0, 1, 1], [], []>} : vector<8x32xbf16>, vector<32x256xbf16>, vector<8x256xf32> -> vector<8x256xf32>
    %22 = arith.addf %18, %21 : vector<8x256xf32>
    %c0_8 = arith.constant 0 : index
    %c0_9 = arith.constant 0 : index
    %23 = vector.load %arg6[%c0_8, %c0_9] : memref<16x256xf32, #tpu.memory_space<vmem>>, vector<1x256xf32>
    %24 = vector.broadcast %23 : vector<1x256xf32> to vector<8x256xf32>
    %25 = arith.addf %22, %24 : vector<8x256xf32>
    %c1 = arith.constant 1 : index
    %c0_10 = arith.constant 0 : index
    %26 = vector.load %arg6[%c1, %c0_10] : memref<16x256xf32, #tpu.memory_space<vmem>>, vector<1x256xf32>
    %c2 = arith.constant 2 : index
    %c0_11 = arith.constant 0 : index
    %27 = vector.load %arg6[%c2, %c0_11] : memref<16x256xf32, #tpu.memory_space<vmem>>, vector<1x256xf32>
    %cst_12 = arith.constant dense<0.000000e+00> : vector<8xf32>
    %28 = vector.multi_reduction <add>, %25, %cst_12 [1] : vector<8x256xf32> to vector<8xf32>
    %29 = vector.shape_cast %28 : vector<8xf32> to vector<8x1xf32>
    %30 = arith.mulf %25, %25 : vector<8x256xf32>
    %cst_13 = arith.constant dense<0.000000e+00> : vector<8xf32>
    %31 = vector.multi_reduction <add>, %30, %cst_13 [1] : vector<8x256xf32> to vector<8xf32>
    %32 = vector.shape_cast %31 : vector<8xf32> to vector<8x1xf32>
    %cst_14 = arith.constant 3.906250e-03 : f32
    %33 = vector.broadcast %cst_14 : f32 to vector<8x1xf32>
    %34 = arith.mulf %29, %33 : vector<8x1xf32>
    %cst_15 = arith.constant 3.906250e-03 : f32
    %35 = vector.broadcast %cst_15 : f32 to vector<8x1xf32>
    %36 = arith.mulf %32, %35 : vector<8x1xf32>
    %37 = arith.mulf %34, %34 : vector<8x1xf32>
    %38 = arith.subf %36, %37 : vector<8x1xf32>
    %39 = vector.broadcast %34 : vector<8x1xf32> to vector<8x256xf32>
    %40 = arith.subf %25, %39 : vector<8x256xf32>
    %cst_16 = arith.constant 9.99999974E-6 : f32
    %41 = vector.broadcast %cst_16 : f32 to vector<8x1xf32>
    %42 = arith.addf %38, %41 : vector<8x1xf32>
    %43 = math.rsqrt %42 : vector<8x1xf32>
    %44 = vector.broadcast %43 : vector<8x1xf32> to vector<8x256xf32>
    %45 = arith.mulf %40, %44 : vector<8x256xf32>
    %46 = vector.broadcast %26 : vector<1x256xf32> to vector<8x256xf32>
    %47 = arith.mulf %45, %46 : vector<8x256xf32>
    %48 = vector.broadcast %27 : vector<1x256xf32> to vector<8x256xf32>
    %49 = arith.addf %47, %48 : vector<8x256xf32>
    %50 = math.tanh %49 : vector<8x256xf32>
    %c0_17 = arith.constant 0 : index
    %c0_18 = arith.constant 0 : index
    %51 = vector.load %arg3[%c0_17, %c0_18] : memref<256x256xbf16, #tpu.memory_space<vmem>>, vector<256x256xbf16>
    %52 = arith.truncf %50 : vector<8x256xf32> to vector<8x256xbf16>
    %cst_19 = arith.constant dense<0.000000e+00> : vector<8x256xf32>
    %53 = tpu.matmul %52, %51, %cst_19 {dimension_numbers = #tpu.dot_dimension_numbers<[1], [0], [0], [1], [0, 0, 1, 1], [], []>} : vector<8x256xbf16>, vector<256x256xbf16>, vector<8x256xf32> -> vector<8x256xf32>
    %c3 = arith.constant 3 : index
    %c0_20 = arith.constant 0 : index
    %54 = vector.load %arg6[%c3, %c0_20] : memref<16x256xf32, #tpu.memory_space<vmem>>, vector<1x256xf32>
    %55 = vector.broadcast %54 : vector<1x256xf32> to vector<8x256xf32>
    %56 = arith.addf %53, %55 : vector<8x256xf32>
    %c4 = arith.constant 4 : index
    %c0_21 = arith.constant 0 : index
    %57 = vector.load %arg6[%c4, %c0_21] : memref<16x256xf32, #tpu.memory_space<vmem>>, vector<1x256xf32>
    %c5 = arith.constant 5 : index
    %c0_22 = arith.constant 0 : index
    %58 = vector.load %arg6[%c5, %c0_22] : memref<16x256xf32, #tpu.memory_space<vmem>>, vector<1x256xf32>
    %cst_23 = arith.constant dense<0.000000e+00> : vector<8xf32>
    %59 = vector.multi_reduction <add>, %56, %cst_23 [1] : vector<8x256xf32> to vector<8xf32>
    %60 = vector.shape_cast %59 : vector<8xf32> to vector<8x1xf32>
    %61 = arith.mulf %56, %56 : vector<8x256xf32>
    %cst_24 = arith.constant dense<0.000000e+00> : vector<8xf32>
    %62 = vector.multi_reduction <add>, %61, %cst_24 [1] : vector<8x256xf32> to vector<8xf32>
    %63 = vector.shape_cast %62 : vector<8xf32> to vector<8x1xf32>
    %cst_25 = arith.constant 3.906250e-03 : f32
    %64 = vector.broadcast %cst_25 : f32 to vector<8x1xf32>
    %65 = arith.mulf %60, %64 : vector<8x1xf32>
    %cst_26 = arith.constant 3.906250e-03 : f32
    %66 = vector.broadcast %cst_26 : f32 to vector<8x1xf32>
    %67 = arith.mulf %63, %66 : vector<8x1xf32>
    %68 = arith.mulf %65, %65 : vector<8x1xf32>
    %69 = arith.subf %67, %68 : vector<8x1xf32>
    %70 = vector.broadcast %65 : vector<8x1xf32> to vector<8x256xf32>
    %71 = arith.subf %56, %70 : vector<8x256xf32>
    %cst_27 = arith.constant 9.99999974E-6 : f32
    %72 = vector.broadcast %cst_27 : f32 to vector<8x1xf32>
    %73 = arith.addf %69, %72 : vector<8x1xf32>
    %74 = math.rsqrt %73 : vector<8x1xf32>
    %75 = vector.broadcast %74 : vector<8x1xf32> to vector<8x256xf32>
    %76 = arith.mulf %71, %75 : vector<8x256xf32>
    %77 = vector.broadcast %57 : vector<1x256xf32> to vector<8x256xf32>
    %78 = arith.mulf %76, %77 : vector<8x256xf32>
    %79 = vector.broadcast %58 : vector<1x256xf32> to vector<8x256xf32>
    %80 = arith.addf %78, %79 : vector<8x256xf32>
    %81 = math.tanh %80 : vector<8x256xf32>
    %c0_28 = arith.constant 0 : index
    %c0_29 = arith.constant 0 : index
    %82 = vector.load %arg4[%c0_28, %c0_29] : memref<256x256xbf16, #tpu.memory_space<vmem>>, vector<256x256xbf16>
    %83 = arith.truncf %81 : vector<8x256xf32> to vector<8x256xbf16>
    %cst_30 = arith.constant dense<0.000000e+00> : vector<8x256xf32>
    %84 = tpu.matmul %83, %82, %cst_30 {dimension_numbers = #tpu.dot_dimension_numbers<[1], [0], [0], [1], [0, 0, 1, 1], [], []>} : vector<8x256xbf16>, vector<256x256xbf16>, vector<8x256xf32> -> vector<8x256xf32>
    %c6 = arith.constant 6 : index
    %c0_31 = arith.constant 0 : index
    %85 = vector.load %arg6[%c6, %c0_31] : memref<16x256xf32, #tpu.memory_space<vmem>>, vector<1x256xf32>
    %86 = vector.broadcast %85 : vector<1x256xf32> to vector<8x256xf32>
    %87 = arith.addf %84, %86 : vector<8x256xf32>
    %c7 = arith.constant 7 : index
    %c0_32 = arith.constant 0 : index
    %88 = vector.load %arg6[%c7, %c0_32] : memref<16x256xf32, #tpu.memory_space<vmem>>, vector<1x256xf32>
    %c8 = arith.constant 8 : index
    %c0_33 = arith.constant 0 : index
    %89 = vector.load %arg6[%c8, %c0_33] : memref<16x256xf32, #tpu.memory_space<vmem>>, vector<1x256xf32>
    %cst_34 = arith.constant dense<0.000000e+00> : vector<8xf32>
    %90 = vector.multi_reduction <add>, %87, %cst_34 [1] : vector<8x256xf32> to vector<8xf32>
    %91 = vector.shape_cast %90 : vector<8xf32> to vector<8x1xf32>
    %92 = arith.mulf %87, %87 : vector<8x256xf32>
    %cst_35 = arith.constant dense<0.000000e+00> : vector<8xf32>
    %93 = vector.multi_reduction <add>, %92, %cst_35 [1] : vector<8x256xf32> to vector<8xf32>
    %94 = vector.shape_cast %93 : vector<8xf32> to vector<8x1xf32>
    %cst_36 = arith.constant 3.906250e-03 : f32
    %95 = vector.broadcast %cst_36 : f32 to vector<8x1xf32>
    %96 = arith.mulf %91, %95 : vector<8x1xf32>
    %cst_37 = arith.constant 3.906250e-03 : f32
    %97 = vector.broadcast %cst_37 : f32 to vector<8x1xf32>
    %98 = arith.mulf %94, %97 : vector<8x1xf32>
    %99 = arith.mulf %96, %96 : vector<8x1xf32>
    %100 = arith.subf %98, %99 : vector<8x1xf32>
    %101 = vector.broadcast %96 : vector<8x1xf32> to vector<8x256xf32>
    %102 = arith.subf %87, %101 : vector<8x256xf32>
    %cst_38 = arith.constant 9.99999974E-6 : f32
    %103 = vector.broadcast %cst_38 : f32 to vector<8x1xf32>
    %104 = arith.addf %100, %103 : vector<8x1xf32>
    %105 = math.rsqrt %104 : vector<8x1xf32>
    %106 = vector.broadcast %105 : vector<8x1xf32> to vector<8x256xf32>
    %107 = arith.mulf %102, %106 : vector<8x256xf32>
    %108 = vector.broadcast %88 : vector<1x256xf32> to vector<8x256xf32>
    %109 = arith.mulf %107, %108 : vector<8x256xf32>
    %110 = vector.broadcast %89 : vector<1x256xf32> to vector<8x256xf32>
    %111 = arith.addf %109, %110 : vector<8x256xf32>
    %112 = math.tanh %111 : vector<8x256xf32>
    %c0_39 = arith.constant 0 : index
    %c0_40 = arith.constant 0 : index
    %113 = vector.load %arg5[%c0_39, %c0_40] : memref<256x256xbf16, #tpu.memory_space<vmem>>, vector<256x256xbf16>
    %114 = arith.truncf %112 : vector<8x256xf32> to vector<8x256xbf16>
    %cst_41 = arith.constant dense<0.000000e+00> : vector<8x256xf32>
    %115 = tpu.matmul %114, %113, %cst_41 {dimension_numbers = #tpu.dot_dimension_numbers<[1], [0], [0], [1], [0, 0, 1, 1], [], []>} : vector<8x256xbf16>, vector<256x256xbf16>, vector<8x256xf32> -> vector<8x256xf32>
    %c9 = arith.constant 9 : index
    %c0_42 = arith.constant 0 : index
    %116 = vector.load %arg6[%c9, %c0_42] : memref<16x256xf32, #tpu.memory_space<vmem>>, vector<1x256xf32>
    %117 = vector.broadcast %116 : vector<1x256xf32> to vector<8x256xf32>
    %118 = arith.addf %115, %117 : vector<8x256xf32>
    %c0_43 = arith.constant 0 : index
    %c0_44 = arith.constant 0 : index
    %119 = vector.load %arg8[%c0_43, %c0_44] : memref<8x256xf32, #tpu.memory_space<vmem>>, vector<8x256xf32>
    tpu.vector_store %arg8[%c0_43, %c0_44], %118 {strides = array<i32>} : memref<8x256xf32, #tpu.memory_space<vmem>>, vector<8x256xf32>,
    %c0_45 = arith.constant 0 : index
    %c0_46 = arith.constant 0 : index
    %120 = vector.load %arg7[%c0_45, %c0_46] : memref<8x256xf32, #tpu.memory_space<vmem>>, vector<8x256xf32>
    %121 = arith.subf %118, %120 : vector<8x256xf32>
    %122 = arith.mulf %121, %121 : vector<8x256xf32>
    %123 = vector.shape_cast %122 : vector<8x256xf32> to vector<1x8x256xf32>
    %cst_47 = arith.constant dense<0.000000e+00> : vector<1xf32>
    %124 = vector.multi_reduction <add>, %123, %cst_47 [1, 2] : vector<1x8x256xf32> to vector<1xf32>
    %125 = vector.shape_cast %124 : vector<1xf32> to vector<1x1x1xf32>
    %126 = vector.extract %125[0, 0, 0] : f32 from vector<1x1x1xf32>
    %127 = vector.broadcast %126 : f32 to vector<1x1xf32>
    %cst_48 = arith.constant 6.250000e-04 : f32
    %128 = vector.broadcast %cst_48 : f32 to vector<1x1xf32>
    %129 = arith.mulf %127, %128 : vector<1x1xf32>
    %c0_49 = arith.constant 0 : index
    %c0_50 = arith.constant 0 : index
    %130 = vector.load %arg9[%c0_49, %c0_50] : memref<1x1xf32, #tpu.memory_space<vmem>>, vector<1x1xf32>
    tpu.vector_store %arg9[%c0_49, %c0_50], %129 {strides = array<i32>} : memref<1x1xf32, #tpu.memory_space<vmem>>, vector<1x1xf32>,
    return
  }
}

</mosaic_0001>

<llo_original>
// kernel: convmorph_oreo_forward.1
$region0: #{convmorph_oreo_forward.1}
  #allocation0 [shape = 'u32[]', space=smem, size = 0x4, offset = 0x4, fixed_abs, tag = 'smem constant byte address 0x4 - core index']
  #allocation1 [shape = 'u32[144,128]{1,0:T(1,128)}', space=vmem, size = 0x12000, scoped, tag = 'internal scratch']
  %s0 = inlined_call_operand.vmem [shape: s32[8,2], index: 0, kind: input, shape index: {}]
  %s1 = inlined_call_operand.vmem [shape: f32[64,32], index: 1, kind: input, shape index: {}]
  %s2 = inlined_call_operand.vmem [shape: bf16[64,256], index: 2, kind: input, shape index: {}]
  %s3 = inlined_call_operand.hbm [shape: bf16[256,256], index: 3, kind: input, shape index: {}]
  %s4 = inlined_call_operand.hbm [shape: bf16[256,256], index: 4, kind: input, shape index: {}]
  %s5 = inlined_call_operand.hbm [shape: bf16[256,256], index: 5, kind: input, shape index: {}]
  %s6 = inlined_call_operand.vmem [shape: f32[16,256], index: 6, kind: input, shape index: {}]
  %s7 = inlined_call_operand.vmem [shape: f32[8,256], index: 7, kind: input, shape index: {}]
  %s8 = inlined_call_operand.hbm [shape: f32[8,256], index: 8, kind: output, shape index: {0}]
  %s9 = inlined_call_operand.hbm [shape: f32[1,1], index: 9, kind: output, shape index: {1}]
  %10 = xla_tuple %s8, %s9
  %s11 = sld [smem:[#allocation0]]
  $region62: #{convmorph_oreo_forward.1} parent=0
    _
  %s13 = ssub.s32 1, %s11
  %s14 = scalar_select 0, %s13, %s11
  $region1: #{convmorph_oreo_forward.1} parent=0
    #allocation2 [shape = 'u8[131072]{0}', space=vmem, size = 0x20000, scoped, tag = 'input window, operand 3, single buffered']
    #allocation3 [shape = 's32[1]{0}', space=sflag, size = 0x4, scoped, tag = 'scoped memory for convmorph_oreo_forward.1']
    #allocation4 [shape = 's32[1]{0}', space=sflag, size = 0x4, scoped, tag = 'scoped memory for convmorph_oreo_forward.1']
    #allocation5 [shape = 'u8[131072]{0}', space=vmem, size = 0x20000, scoped, tag = 'input window, operand 4, single buffered']
    #allocation6 [shape = 's32[1]{0}', space=sflag, size = 0x4, scoped, tag = 'scoped memory for convmorph_oreo_forward.1']
    #allocation7 [shape = 'u8[131072]{0}', space=vmem, size = 0x20000, scoped, tag = 'input window, operand 5, single buffered']
    #allocation8 [shape = 'u8[8192]{0}', space=vmem, size = 0x2000, scoped, tag = 'output window, operand 0, single buffered']
    #allocation9 [shape = 'u8[512]{0}', space=vmem, size = 0x400, scoped, tag = 'output window, operand 1, single buffered']
    #allocation10 [shape = 's32[1]{0}', space=sflag, size = 0x4, scoped, tag = 'scoped memory for convmorph_oreo_forward.1']
    %15 = vsyncpa [#allocation3], 0
    %16 = vsyncpa [#allocation6], 0
    %17 = vsyncpa [#allocation4], 0
    %18 = vsyncpa [#allocation10], 0
    // Predicated region
    $region2: #{convmorph_oreo_forward.1} parent=1 // pred_check
      _
    $region3: #{convmorph_oreo_forward.1} parent=1 // pred_check_branch
      %20 = sbr.rel (0) target = $region5
    $region4: #{convmorph_oreo_forward.1} parent=1 // pred_region
      _
    $region5: #{convmorph_oreo_forward.1} parent=1 // pred_fallthru
      _
    // Predicated region
    $region6: #{convmorph_oreo_forward.1} parent=1 // pred_check
      _
    $region7: #{convmorph_oreo_forward.1} parent=1 // pred_check_branch
      %22 = sbr.rel (0) target = $region9
    $region8: #{convmorph_oreo_forward.1} parent=1 // pred_region
      _
    $region9: #{convmorph_oreo_forward.1} parent=1 // pred_fallthru
      _
    // Predicated region
    $region10: #{convmorph_oreo_forward.1} parent=1 // pred_check
      _
    $region11: #{convmorph_oreo_forward.1} parent=1 // pred_check_branch
      %24 = sbr.rel (0) target = $region13
    $region12: #{convmorph_oreo_forward.1} parent=1 // pred_region
      _
    $region13: #{convmorph_oreo_forward.1} parent=1 // pred_fallthru
      _
    // Predicated region
    $region14: #{convmorph_oreo_forward.1} parent=1 // pred_check
      _
    $region15: #{convmorph_oreo_forward.1} parent=1 // pred_check_branch
      %26 = sbr.rel (0) target = $region17
    $region16: #{convmorph_oreo_forward.1} parent=1 // pred_region
      %s28 = ssub.s32 4096, 4096
      %29 = vsyncadd [#allocation3], %s28
      %s30 = sshll.u32 [#allocation2], 4
      %s31 = int_to_ptr.vmem [resolvable:$true] %s30
      %36 = dma.hbm_to_vmem [thread:$0]  %s3, 4096, %s31, [#allocation3], 128, 128, 8
    $region17: #{convmorph_oreo_forward.1} parent=1 // pred_fallthru
      _
    // Predicated region
    $region18: #{convmorph_oreo_forward.1} parent=1 // pred_check
      _
    $region19: #{convmorph_oreo_forward.1} parent=1 // pred_check_branch
      %38 = sbr.rel (0) target = $region21
    $region20: #{convmorph_oreo_forward.1} parent=1 // pred_region
      %s40 = ssub.s32 4096, 4096
      %41 = vsyncadd [#allocation6], %s40
      %s42 = sshll.u32 [#allocation5], 4
      %s43 = int_to_ptr.vmem [resolvable:$true] %s42
      %48 = dma.hbm_to_vmem [thread:$0]  %s4, 4096, %s43, [#allocation6], 128, 128, 8
    $region21: #{convmorph_oreo_forward.1} parent=1 // pred_fallthru
      _
    // Predicated region
    $region22: #{convmorph_oreo_forward.1} parent=1 // pred_check
      _
    $region23: #{convmorph_oreo_forward.1} parent=1 // pred_check_branch
      %50 = sbr.rel (0) target = $region25
    $region24: #{convmorph_oreo_forward.1} parent=1 // pred_region
      %s52 = ssub.s32 4096, 4096
      %53 = vsyncadd [#allocation6], %s52
      %s54 = sshll.u32 [#allocation7], 4
      %s55 = int_to_ptr.vmem [resolvable:$true] %s54
      %60 = dma.hbm_to_vmem [thread:$0]  %s5, 4096, %s55, [#allocation6], 128, 128, 8
    $region25: #{convmorph_oreo_forward.1} parent=1 // pred_fallthru
      _
    // Predicated region
    $region26: #{convmorph_oreo_forward.1} parent=1 // pred_check
      _
    $region27: #{convmorph_oreo_forward.1} parent=1 // pred_check_branch
      %62 = sbr.rel (0) target = $region29
    $region28: #{convmorph_oreo_forward.1} parent=1 // pred_region
      _
    $region29: #{convmorph_oreo_forward.1} parent=1 // pred_fallthru
      _
    // Predicated region
    $region30: #{convmorph_oreo_forward.1} parent=1 // pred_check
      _
    $region31: #{convmorph_oreo_forward.1} parent=1 // pred_check_branch
      %64 = sbr.rel (0) target = $region33
    $region32: #{convmorph_oreo_forward.1} parent=1 // pred_region
      _
    $region33: #{convmorph_oreo_forward.1} parent=1 // pred_fallthru
      _
    // Predicated region
    $region34: #{convmorph_oreo_forward.1} parent=1 // pred_check
      _
    $region35: #{convmorph_oreo_forward.1} parent=1 // pred_check_branch
      %66 = sbr.rel (0) target = $region37
    $region36: #{convmorph_oreo_forward.1} parent=1 // pred_region
      %67 = dma.done [#allocation3], 4096
    $region37: #{convmorph_oreo_forward.1} parent=1 // pred_fallthru
      _
    // Predicated region
    $region38: #{convmorph_oreo_forward.1} parent=1 // pred_check
      _
    $region39: #{convmorph_oreo_forward.1} parent=1 // pred_check_branch
      %69 = sbr.rel (0) target = $region41
    $region40: #{convmorph_oreo_forward.1} parent=1 // pred_region
      %70 = dma.done [#allocation6], 4096
    $region41: #{convmorph_oreo_forward.1} parent=1 // pred_fallthru
      _
    // Predicated region
    $region42: #{convmorph_oreo_forward.1} parent=1 // pred_check
      _
    $region43: #{convmorph_oreo_forward.1} parent=1 // pred_check_branch
      %72 = sbr.rel (0) target = $region45
    $region44: #{convmorph_oreo_forward.1} parent=1 // pred_region
      %73 = dma.done [#allocation6], 4096
    $region45: #{convmorph_oreo_forward.1} parent=1 // pred_fallthru
      _
    %v75 = vld [vmem:[%s0] sm:$0xff]
    %v76 = vlaneseq
    %v77 = vand.u32 %v76, 127
    %v78 = vld [vmem:[%s1] sm:$0xff]
    %v79 = vld [vmem:[%s1 + $0x8] sm:$0xff]
    %v80 = vld [vmem:[%s1 + $0x10] sm:$0xff]
    %v81 = vld [vmem:[%s1 + $0x18] sm:$0xff]
    %v82 = vld [vmem:[%s1 + $0x20] sm:$0xff]
    %v83 = vld [vmem:[%s1 + $0x28] sm:$0xff]
    %v84 = vld [vmem:[%s1 + $0x30] sm:$0xff]
    %v85 = vld [vmem:[%s1 + $0x38] sm:$0xff]
    %86 = vset.pattern.permute.xlu0 0
    %87 = vperm.xlu0 %86, %v75
    %v88 = vpop.permute.xlu0 %87
    %vm89 = vcmp.eq.s32.totalorder %v77, %v88
    %v90 = vsel %vm89, 1, 0
    %v91 = vcvt.s32.f32 %v90
    %vm92 = vcmask 523264
    %v94 = vsel %vm92, %v91, 0
    %96 = vmatprep.subr.mxu0 0.0
    %97 = vmatpush1.msra.mxu0 0.0
    %98 = vmatprep.subr.mxu0 0.0
    %99 = vmatpush1.msra.mxu0 0.0
    %100 = vmatprep.subr.mxu0 0.0
    %101 = vmatpush1.msra.mxu0 0.0
    %102 = vmatprep.subr.mxu0 0.0
    %103 = vmatpush1.msra.mxu0 0.0
    %104 = vmatprep.subr.mxu0 0.0
    %105 = vmatpush1.msra.mxu0 0.0
    %106 = vmatprep.subr.mxu0 0.0
    %107 = vmatpush1.msra.mxu0 0.0
    %108 = vmatprep.subr.mxu0 0.0
    %109 = vmatpush1.msra.mxu0 0.0
    %110 = vmatprep.subr.mxu0 0.0
    %111 = vmatpush1.msra.mxu0 0.0
    %112 = vmatprep.subr.mxu0 0.0
    %113 = vmatpush1.msra.mxu0 %v85
    %114 = vmatprep.subr.mxu0 0.0
    %115 = vmatpush1.msra.mxu0 %v84
    %116 = vmatprep.subr.mxu0 0.0
    %117 = vmatpush1.msra.mxu0 %v83
    %118 = vmatprep.subr.mxu0 0.0
    %119 = vmatpush1.msra.mxu0 %v82
    %120 = vmatprep.subr.mxu0 0.0
    %121 = vmatpush1.msra.mxu0 %v81
    %122 = vmatprep.subr.mxu0 0.0
    %123 = vmatpush1.msra.mxu0 %v80
    %124 = vmatprep.subr.mxu0 0.0
    %125 = vmatpush1.msra.mxu0 %v79
    %126 = vmatprep.subr.mxu0 0.0
    %127 = vmatpush1.msra.mxu0 %v78
    %128 = vmatprep.subr.mxu0 0.0
    %129 = vmatpush2.msra.mxu0 0.0
    %130 = vmatprep.subr.mxu0 0.0
    %131 = vmatpush2.msra.mxu0 0.0
    %132 = vmatprep.subr.mxu0 0.0
    %133 = vmatpush2.msra.mxu0 0.0
    %134 = vmatprep.subr.mxu0 0.0
    %135 = vmatpush2.msra.mxu0 0.0
    %136 = vmatprep.subr.mxu0 0.0
    %137 = vmatpush2.msra.mxu0 0.0
    %138 = vmatprep.subr.mxu0 0.0
    %139 = vmatpush2.msra.mxu0 0.0
    %140 = vmatprep.subr.mxu0 0.0
    %141 = vmatpush2.msra.mxu0 0.0
    %142 = vmatprep.subr.mxu0 0.0
    %143 = vmatpush2.msra.mxu0 0.0
    %144 = vmatprep.subr.mxu0 0.0
    %145 = vmatpush2.msra.mxu0 0.0
    %146 = vmatprep.subr.mxu0 0.0
    %147 = vmatpush2.msra.mxu0 0.0
    %148 = vmatprep.subr.mxu0 0.0
    %149 = vmatpush2.msra.mxu0 0.0
    %150 = vmatprep.subr.mxu0 0.0
    %151 = vmatpush2.msra.mxu0 0.0
    %152 = vmatprep.subr.mxu0 0.0
    %153 = vmatpush2.msra.mxu0 0.0
    %154 = vmatprep.subr.mxu0 0.0
    %155 = vmatpush2.msra.mxu0 0.0
    %156 = vmatprep.subr.mxu0 0.0
    %157 = vmatpush2.msra.mxu0 0.0
    %158 = vmatprep.subr.mxu0 0.0
    %159 = vmatpush2.msra.mxu0 0.0
    %160 = vmatprep.mubr.f32.mxu0 0.0
    %161 = vmatmul.mubr.f32.gmra.mxu0 %v94
    %v162 = vpop.f32.mrf.mxu0
    %v163 = vadd.f32 0.0, %v162
    %v164 = vpop.f32.mrf.mxu0
    %165 = vdwg.mxu0
    %166 = vset.pattern.permute.xlu0 1
    %167 = vperm.xlu0 %166, %v75
    %v168 = vpop.permute.xlu0 %167
    %vm169 = vcmp.eq.s32.totalorder %v77, %v168
    %v170 = vsel %vm169, 1, 0
    %v171 = vcvt.s32.f32 %v170
    %v173 = vsel %vm92, %v171, 0
    %175 = vmatprep.subr.mxu0 0.0
    %176 = vmatpush1.msra.mxu0 0.0
    %177 = vmatprep.subr.mxu0 0.0
    %178 = vmatpush1.msra.mxu0 0.0
    %179 = vmatprep.subr.mxu0 0.0
    %180 = vmatpush1.msra.mxu0 0.0
    %181 = vmatprep.subr.mxu0 0.0
    %182 = vmatpush1.msra.mxu0 0.0
    %183 = vmatprep.subr.mxu0 0.0
    %184 = vmatpush1.msra.mxu0 0.0
    %185 = vmatprep.subr.mxu0 0.0
    %186 = vmatpush1.msra.mxu0 0.0
    %187 = vmatprep.subr.mxu0 0.0
    %188 = vmatpush1.msra.mxu0 0.0
    %189 = vmatprep.subr.mxu0 0.0
    %190 = vmatpush1.msra.mxu0 0.0
    %191 = vmatprep.subr.mxu0 0.0
    %192 = vmatpush1.msra.mxu0 %v85
    %193 = vmatprep.subr.mxu0 0.0
    %194 = vmatpush1.msra.mxu0 %v84
    %195 = vmatprep.subr.mxu0 0.0
    %196 = vmatpush1.msra.mxu0 %v83
    %197 = vmatprep.subr.mxu0 0.0
    %198 = vmatpush1.msra.mxu0 %v82
    %199 = vmatprep.subr.mxu0 0.0
    %200 = vmatpush1.msra.mxu0 %v81
    %201 = vmatprep.subr.mxu0 0.0
    %202 = vmatpush1.msra.mxu0 %v80
    %203 = vmatprep.subr.mxu0 0.0
    %204 = vmatpush1.msra.mxu0 %v79
    %205 = vmatprep.subr.mxu0 0.0
    %206 = vmatpush1.msra.mxu0 %v78
    %207 = vmatprep.subr.mxu0 0.0
    %208 = vmatpush2.msra.mxu0 0.0
    %209 = vmatprep.subr.mxu0 0.0
    %210 = vmatpush2.msra.mxu0 0.0
    %211 = vmatprep.subr.mxu0 0.0
    %212 = vmatpush2.msra.mxu0 0.0
    %213 = vmatprep.subr.mxu0 0.0
    %214 = vmatpush2.msra.mxu0 0.0
    %215 = vmatprep.subr.mxu0 0.0
    %216 = vmatpush2.msra.mxu0 0.0
    %217 = vmatprep.subr.mxu0 0.0
    %218 = vmatpush2.msra.mxu0 0.0
    %219 = vmatprep.subr.mxu0 0.0
    %220 = vmatpush2.msra.mxu0 0.0
    %221 = vmatprep.subr.mxu0 0.0
    %222 = vmatpush2.msra.mxu0 0.0
    %223 = vmatprep.subr.mxu0 0.0
    %224 = vmatpush2.msra.mxu0 0.0
    %225 = vmatprep.subr.mxu0 0.0
    %226 = vmatpush2.msra.mxu0 0.0
    %227 = vmatprep.subr.mxu0 0.0
    %228 = vmatpush2.msra.mxu0 0.0
    %229 = vmatprep.subr.mxu0 0.0
    %230 = vmatpush2.msra.mxu0 0.0
    %231 = vmatprep.subr.mxu0 0.0
    %232 = vmatpush2.msra.mxu0 0.0
    %233 = vmatprep.subr.mxu0 0.0
    %234 = vmatpush2.msra.mxu0 0.0
    %235 = vmatprep.subr.mxu0 0.0
    %236 = vmatpush2.msra.mxu0 0.0
    %237 = vmatprep.subr.mxu0 0.0
    %238 = vmatpush2.msra.mxu0 0.0
    %239 = vmatprep.mubr.f32.mxu0 0.0
    %240 = vmatmul.mubr.f32.gmra.mxu0 %v173
    %v241 = vpop.f32.mrf.mxu0
    %v242 = vadd.f32 0.0, %v241
    %v243 = vpop.f32.mrf.mxu0
    %244 = vdwg.mxu0
    %v245 = vld [vmem:[%s2] sm:$0xff]
    %v246 = vld [vmem:[%s2 + $0x8] sm:$0xff]
    %v247 = vld [vmem:[%s2 + $0x10] sm:$0xff]
    %v248 = vld [vmem:[%s2 + $0x18] sm:$0xff]
    %v249 = vld [vmem:[%s2 + $0x20] sm:$0xff]
    %v250 = vld [vmem:[%s2 + $0x28] sm:$0xff]
    %v251 = vld [vmem:[%s2 + $0x30] sm:$0xff]
    %v252 = vld [vmem:[%s2 + $0x38] sm:$0xff]
    %v253 = vpack.c.bf16 %v163, %v163
    %v254 = vpack.c.bf16 %v242, %v242
    %v259 = vunpack.c.l.b16 %v249
    %v260 = vunpack.c.h.b16 %v249
    %v261 = vunpack.c.l.b16 %v250
    %v262 = vunpack.c.h.b16 %v250
    %v263 = vunpack.c.l.b16 %v251
    %v264 = vunpack.c.h.b16 %v251
    %v265 = vunpack.c.l.b16 %v252
    %v266 = vunpack.c.h.b16 %v252
    %v267 = vpack.c.b16 %v261, %v259
    %v268 = vpack.c.b16 %v262, %v260
    %v269 = vpack.c.b16 %v265, %v263
    %v270 = vpack.c.b16 %v266, %v264
    %vm275 = vcmask 261120
    %v277 = vsel %vm275, %v254, 0
    %279 = vmatprep.subr.bf16.mxu0 0
    %280 = vmatpush1.bf16.msra.mxu0 0
    %281 = vmatprep.subr.bf16.mxu0 0
    %282 = vmatpush1.bf16.msra.mxu0 0
    %283 = vmatprep.subr.bf16.mxu0 0
    %284 = vmatpush1.bf16.msra.mxu0 0
    %285 = vmatprep.subr.bf16.mxu0 0
    %286 = vmatpush1.bf16.msra.mxu0 0
    %287 = vmatprep.subr.bf16.mxu0 0
    %288 = vmatpush1.bf16.msra.mxu0 0
    %289 = vmatprep.subr.bf16.mxu0 0
    %290 = vmatpush1.bf16.msra.mxu0 0
    %291 = vmatprep.subr.bf16.mxu0 %v270
    %292 = vmatpush1.bf16.msra.mxu0 %v269
    %293 = vmatprep.subr.bf16.mxu0 %v268
    %294 = vmatpush1.bf16.msra.mxu0 %v267
    %295 = vmatprep.subr.bf16.mxu0 0
    %296 = vmatpush2.bf16.msra.mxu0 0
    %297 = vmatprep.subr.bf16.mxu0 0
    %298 = vmatpush2.bf16.msra.mxu0 0
    %299 = vmatprep.subr.bf16.mxu0 0
    %300 = vmatpush2.bf16.msra.mxu0 0
    %301 = vmatprep.subr.bf16.mxu0 0
    %302 = vmatpush2.bf16.msra.mxu0 0
    %303 = vmatprep.subr.bf16.mxu0 0
    %304 = vmatpush2.bf16.msra.mxu0 0
    %305 = vmatprep.subr.bf16.mxu0 0
    %306 = vmatpush2.bf16.msra.mxu0 0
    %307 = vmatprep.subr.bf16.mxu0 0
    %308 = vmatpush2.bf16.msra.mxu0 0
    %309 = vmatprep.subr.bf16.mxu0 0
    %310 = vmatpush2.bf16.msra.mxu0 0
    %311 = vmatprep.mubr.bf16.mxu0 0
    %312 = vmatmul.mubr.bf16.gmra.mxu0 %v277
    %v313 = vpop.f32.mrf.mxu0
    %v314 = vadd.f32 0.0, %v313
    %v315 = vpop.f32.mrf.mxu0
    %v316 = vadd.f32 0.0, %v315
    %v317 = vpop.f32.mrf.mxu0
    %v318 = vpop.f32.mrf.mxu0
    %319 = vdwg.mxu0
    %v324 = vunpack.c.l.b16 %v245
    %v325 = vunpack.c.h.b16 %v245
    %v326 = vunpack.c.l.b16 %v246
    %v327 = vunpack.c.h.b16 %v246
    %v328 = vunpack.c.l.b16 %v247
    %v329 = vunpack.c.h.b16 %v247
    %v330 = vunpack.c.l.b16 %v248
    %v331 = vunpack.c.h.b16 %v248
    %v332 = vpack.c.b16 %v326, %v324
    %v333 = vpack.c.b16 %v327, %v325
    %v334 = vpack.c.b16 %v330, %v328
    %v335 = vpack.c.b16 %v331, %v329
    %v341 = vsel %vm275, %v253, 0
    %343 = vmatprep.subr.bf16.mxu0 0
    %344 = vmatpush1.bf16.msra.mxu0 0
    %345 = vmatprep.subr.bf16.mxu0 0
    %346 = vmatpush1.bf16.msra.mxu0 0
    %347 = vmatprep.subr.bf16.mxu0 0
    %348 = vmatpush1.bf16.msra.mxu0 0
    %349 = vmatprep.subr.bf16.mxu0 0
    %350 = vmatpush1.bf16.msra.mxu0 0
    %351 = vmatprep.subr.bf16.mxu0 0
    %352 = vmatpush1.bf16.msra.mxu0 0
    %353 = vmatprep.subr.bf16.mxu0 0
    %354 = vmatpush1.bf16.msra.mxu0 0
    %355 = vmatprep.subr.bf16.mxu0 %v335
    %356 = vmatpush1.bf16.msra.mxu0 %v334
    %357 = vmatprep.subr.bf16.mxu0 %v333
    %358 = vmatpush1.bf16.msra.mxu0 %v332
    %359 = vmatprep.subr.bf16.mxu0 0
    %360 = vmatpush2.bf16.msra.mxu0 0
    %361 = vmatprep.subr.bf16.mxu0 0
    %362 = vmatpush2.bf16.msra.mxu0 0
    %363 = vmatprep.subr.bf16.mxu0 0
    %364 = vmatpush2.bf16.msra.mxu0 0
    %365 = vmatprep.subr.bf16.mxu0 0
    %366 = vmatpush2.bf16.msra.mxu0 0
    %367 = vmatprep.subr.bf16.mxu0 0
    %368 = vmatpush2.bf16.msra.mxu0 0
    %369 = vmatprep.subr.bf16.mxu0 0
    %370 = vmatpush2.bf16.msra.mxu0 0
    %371 = vmatprep.subr.bf16.mxu0 0
    %372 = vmatpush2.bf16.msra.mxu0 0
    %373 = vmatprep.subr.bf16.mxu0 0
    %374 = vmatpush2.bf16.msra.mxu0 0
    %375 = vmatprep.mubr.bf16.mxu0 0
    %376 = vmatmul.mubr.bf16.gmra.mxu0 %v341
    %v377 = vpop.f32.mrf.mxu0
    %v378 = vadd.f32 %v314, %v377
    %v379 = vpop.f32.mrf.mxu0
    %v380 = vadd.f32 %v316, %v379
    %v381 = vpop.f32.mrf.mxu0
    %v382 = vpop.f32.mrf.mxu0
    %383 = vdwg.mxu0
    %v384 = vld [vmem:[%s6] ss:$8 sm:$0x3]
    %v386 = vlaneseq
    %v387 = vshrl.u32 %v386, 7
    %v388 = vsub.s32 0, %v387
    %v389 = vrot.slane %v384, %v388
    %v390 = vlaneseq
    %v391 = vshrl.u32 %v390, 7
    %v392 = vsub.s32 1, %v391
    %v393 = vrot.slane %v384, %v392
    %v396 = vadd.f32 %v378, %v389
    %v397 = vadd.f32 %v380, %v393
    %s398 = scalar_lea.vmem %s6, 1
    %v399 = vld [vmem:[%s398] ss:$8 sm:$0x3]
    %s400 = scalar_lea.vmem %s6, 2
    %v401 = vld [vmem:[%s400] ss:$8 sm:$0x3]
    %v402 = vadd.f32 %v396, %v397
    %403 = vadd.xlane.f32.xlu0 %v402
    %v404 = vpop.xlane.xlu0 %403
    %v405 = vmul.f32 %v396, %v396
    %v406 = vmul.f32 %v397, %v397
    %v407 = vadd.f32 %v405, %v406
    %408 = vadd.xlane.f32.xlu0 %v407
    %v409 = vpop.xlane.xlu0 %408
    %v410 = vmul.f32 %v404, 0.00390625
    %v411 = vmul.f32 %v409, 0.00390625
    %v412 = vmul.f32 %v410, %v410
    %v413 = vsub.f32 %v411, %v412
    %v414 = vsub.f32 %v396, %v410
    %v415 = vsub.f32 %v397, %v410
    %v416 = vadd.f32 %v413, 1e-05
    %v417 = vrsqrt.pop %v416
    %v418 = vmul.f32 %v414, %v417
    %v419 = vmul.f32 %v415, %v417
    %v421 = vlaneseq
    %v422 = vshrl.u32 %v421, 7
    %v423 = vsub.s32 0, %v422
    %v424 = vrot.slane %v399, %v423
    %v425 = vlaneseq
    %v426 = vshrl.u32 %v425, 7
    %v427 = vsub.s32 1, %v426
    %v428 = vrot.slane %v399, %v427
    %v431 = vmul.f32 %v418, %v424
    %v432 = vmul.f32 %v419, %v428
    %v434 = vlaneseq
    %v435 = vshrl.u32 %v434, 7
    %v436 = vsub.s32 0, %v435
    %v437 = vrot.slane %v401, %v436
    %v438 = vlaneseq
    %v439 = vshrl.u32 %v438, 7
    %v440 = vsub.s32 1, %v439
    %v441 = vrot.slane %v401, %v440
    %v444 = vadd.f32 %v431, %v437
    %v445 = vadd.f32 %v432, %v441
    %v446 = vtanh.pop %v444
    %v447 = vtanh.pop %v445
    %v448 = vld [vmem:[#allocation2] sm:$0xff]
    %v449 = vld [vmem:[#allocation2 + $0x8] sm:$0xff]
    %v450 = vld [vmem:[#allocation2 + $0x10] sm:$0xff]
    %v451 = vld [vmem:[#allocation2 + $0x18] sm:$0xff]
    %v452 = vld [vmem:[#allocation2 + $0x20] sm:$0xff]
    %v453 = vld [vmem:[#allocation2 + $0x28] sm:$0xff]
    %v454 = vld [vmem:[#allocation2 + $0x30] sm:$0xff]
    %v455 = vld [vmem:[#allocation2 + $0x38] sm:$0xff]
    %v456 = vld [vmem:[#allocation2 + $0x40] sm:$0xff]
    %v457 = vld [vmem:[#allocation2 + $0x48] sm:$0xff]
    %v458 = vld [vmem:[#allocation2 + $0x50] sm:$0xff]
    %v459 = vld [vmem:[#allocation2 + $0x58] sm:$0xff]
    %v460 = vld [vmem:[#allocation2 + $0x60] sm:$0xff]
    %v461 = vld [vmem:[#allocation2 + $0x68] sm:$0xff]
    %v462 = vld [vmem:[#allocation2 + $0x70] sm:$0xff]
    %v463 = vld [vmem:[#allocation2 + $0x78] sm:$0xff]
    %v464 = vld [vmem:[#allocation2 + $0x80] sm:$0xff]
    %v465 = vld [vmem:[#allocation2 + $0x88] sm:$0xff]
    %v466 = vld [vmem:[#allocation2 + $0x90] sm:$0xff]
    %v467 = vld [vmem:[#allocation2 + $0x98] sm:$0xff]
    %v468 = vld [vmem:[#allocation2 + $0xa0] sm:$0xff]
    %v469 = vld [vmem:[#allocation2 + $0xa8] sm:$0xff]
    %v470 = vld [vmem:[#allocation2 + $0xb0] sm:$0xff]
    %v471 = vld [vmem:[#allocation2 + $0xb8] sm:$0xff]
    %v472 = vld [vmem:[#allocation2 + $0xc0] sm:$0xff]
    %v473 = vld [vmem:[#allocation2 + $0xc8] sm:$0xff]
    %v474 = vld [vmem:[#allocation2 + $0xd0] sm:$0xff]
    %v475 = vld [vmem:[#allocation2 + $0xd8] sm:$0xff]
    %v476 = vld [vmem:[#allocation2 + $0xe0] sm:$0xff]
    %v477 = vld [vmem:[#allocation2 + $0xe8] sm:$0xff]
    %v478 = vld [vmem:[#allocation2 + $0xf0] sm:$0xff]
    %v479 = vld [vmem:[#allocation2 + $0xf8] sm:$0xff]
    %v480 = vpack.c.bf16 %v446, %v446
    %v481 = vpack.c.bf16 %v447, %v447
    %s482 = scalar_lea.vmem %s6, 3
    %v483 = vld [vmem:[%s482] ss:$8 sm:$0x3]
    %v485 = vlaneseq
    %v486 = vshrl.u32 %v485, 7
    %v487 = vsub.s32 0, %v486
    %v488 = vrot.slane %v483, %v487
    %v489 = vlaneseq
    %v490 = vshrl.u32 %v489, 7
    %v491 = vsub.s32 1, %v490
    %v492 = vrot.slane %v483, %v491
    %v527 = vunpack.c.l.b16 %v448
    %v528 = vunpack.c.h.b16 %v448
    %v529 = vunpack.c.l.b16 %v449
    %v530 = vunpack.c.h.b16 %v449
    %v531 = vunpack.c.l.b16 %v450
    %v532 = vunpack.c.h.b16 %v450
    %v533 = vunpack.c.l.b16 %v451
    %v534 = vunpack.c.h.b16 %v451
    %v535 = vunpack.c.l.b16 %v452
    %v536 = vunpack.c.h.b16 %v452
    %v537 = vunpack.c.l.b16 %v453
    %v538 = vunpack.c.h.b16 %v453
    %v539 = vunpack.c.l.b16 %v454
    %v540 = vunpack.c.h.b16 %v454
    %v541 = vunpack.c.l.b16 %v455
    %v542 = vunpack.c.h.b16 %v455
    %v543 = vunpack.c.l.b16 %v456
    %v544 = vunpack.c.h.b16 %v456
    %v545 = vunpack.c.l.b16 %v457
    %v546 = vunpack.c.h.b16 %v457
    %v547 = vunpack.c.l.b16 %v458
    %v548 = vunpack.c.h.b16 %v458
    %v549 = vunpack.c.l.b16 %v459
    %v550 = vunpack.c.h.b16 %v459
    %v551 = vunpack.c.l.b16 %v460
    %v552 = vunpack.c.h.b16 %v460
    %v553 = vunpack.c.l.b16 %v461
    %v554 = vunpack.c.h.b16 %v461
    %v555 = vunpack.c.l.b16 %v462
    %v556 = vunpack.c.h.b16 %v462
    %v557 = vunpack.c.l.b16 %v463
    %v558 = vunpack.c.h.b16 %v463
    %v559 = vunpack.c.l.b16 %v464
    %v560 = vunpack.c.h.b16 %v464
    %v561 = vunpack.c.l.b16 %v465
    %v562 = vunpack.c.h.b16 %v465
    %v563 = vunpack.c.l.b16 %v466
    %v564 = vunpack.c.h.b16 %v466
    %v565 = vunpack.c.l.b16 %v467
    %v566 = vunpack.c.h.b16 %v467
    %v567 = vunpack.c.l.b16 %v468
    %v568 = vunpack.c.h.b16 %v468
    %v569 = vunpack.c.l.b16 %v469
    %v570 = vunpack.c.h.b16 %v469
    %v571 = vunpack.c.l.b16 %v470
    %v572 = vunpack.c.h.b16 %v470
    %v573 = vunpack.c.l.b16 %v471
    %v574 = vunpack.c.h.b16 %v471
    %v575 = vunpack.c.l.b16 %v472
    %v576 = vunpack.c.h.b16 %v472
    %v577 = vunpack.c.l.b16 %v473
    %v578 = vunpack.c.h.b16 %v473
    %v579 = vunpack.c.l.b16 %v474
    %v580 = vunpack.c.h.b16 %v474
    %v581 = vunpack.c.l.b16 %v475
    %v582 = vunpack.c.h.b16 %v475
    %v583 = vunpack.c.l.b16 %v476
    %v584 = vunpack.c.h.b16 %v476
    %v585 = vunpack.c.l.b16 %v477
    %v586 = vunpack.c.h.b16 %v477
    %v587 = vunpack.c.l.b16 %v478
    %v588 = vunpack.c.h.b16 %v478
    %v589 = vunpack.c.l.b16 %v479
    %v590 = vunpack.c.h.b16 %v479
    %v591 = vpack.c.b16 %v529, %v527
    %v592 = vpack.c.b16 %v530, %v528
    %v593 = vpack.c.b16 %v533, %v531
    %v594 = vpack.c.b16 %v534, %v532
    %v595 = vpack.c.b16 %v537, %v535
    %v596 = vpack.c.b16 %v538, %v536
    %v597 = vpack.c.b16 %v541, %v539
    %v598 = vpack.c.b16 %v542, %v540
    %v599 = vpack.c.b16 %v545, %v543
    %v600 = vpack.c.b16 %v546, %v544
    %v601 = vpack.c.b16 %v549, %v547
    %v602 = vpack.c.b16 %v550, %v548
    %v603 = vpack.c.b16 %v553, %v551
    %v604 = vpack.c.b16 %v554, %v552
    %v605 = vpack.c.b16 %v557, %v555
    %v606 = vpack.c.b16 %v558, %v556
    %v607 = vpack.c.b16 %v561, %v559
    %v608 = vpack.c.b16 %v562, %v560
    %v609 = vpack.c.b16 %v565, %v563
    %v610 = vpack.c.b16 %v566, %v564
    %v611 = vpack.c.b16 %v569, %v567
    %v612 = vpack.c.b16 %v570, %v568
    %v613 = vpack.c.b16 %v573, %v571
    %v614 = vpack.c.b16 %v574, %v572
    %v615 = vpack.c.b16 %v577, %v575
    %v616 = vpack.c.b16 %v578, %v576
    %v617 = vpack.c.b16 %v581, %v579
    %v618 = vpack.c.b16 %v582, %v580
    %v619 = vpack.c.b16 %v585, %v583
    %v620 = vpack.c.b16 %v586, %v584
    %v621 = vpack.c.b16 %v589, %v587
    %v622 = vpack.c.b16 %v590, %v588
    %655 = vmatprep.subr.bf16.mxu0 %v606
    %656 = vmatpush1.bf16.msra.mxu0 %v605
    %657 = vmatprep.subr.bf16.mxu0 %v604
    %658 = vmatpush1.bf16.msra.mxu0 %v603
    %659 = vmatprep.subr.bf16.mxu0 %v602
    %660 = vmatpush1.bf16.msra.mxu0 %v601
    %661 = vmatprep.subr.bf16.mxu0 %v600
    %662 = vmatpush1.bf16.msra.mxu0 %v599
    %663 = vmatprep.subr.bf16.mxu0 %v598
    %664 = vmatpush1.bf16.msra.mxu0 %v597
    %665 = vmatprep.subr.bf16.mxu0 %v596
    %666 = vmatpush1.bf16.msra.mxu0 %v595
    %667 = vmatprep.subr.bf16.mxu0 %v594
    %668 = vmatpush1.bf16.msra.mxu0 %v593
    %669 = vmatprep.subr.bf16.mxu0 %v592
    %670 = vmatpush1.bf16.msra.mxu0 %v591
    %671 = vmatprep.subr.bf16.mxu0 %v622
    %672 = vmatpush2.bf16.msra.mxu0 %v621
    %673 = vmatprep.subr.bf16.mxu0 %v620
    %674 = vmatpush2.bf16.msra.mxu0 %v619
    %675 = vmatprep.subr.bf16.mxu0 %v618
    %676 = vmatpush2.bf16.msra.mxu0 %v617
    %677 = vmatprep.subr.bf16.mxu0 %v616
    %678 = vmatpush2.bf16.msra.mxu0 %v615
    %679 = vmatprep.subr.bf16.mxu0 %v614
    %680 = vmatpush2.bf16.msra.mxu0 %v613
    %681 = vmatprep.subr.bf16.mxu0 %v612
    %682 = vmatpush2.bf16.msra.mxu0 %v611
    %683 = vmatprep.subr.bf16.mxu0 %v610
    %684 = vmatpush2.bf16.msra.mxu0 %v609
    %685 = vmatprep.subr.bf16.mxu0 %v608
    %686 = vmatpush2.bf16.msra.mxu0 %v607
    %687 = vmatprep.mubr.bf16.mxu0 %v481
    %688 = vmatmul.mubr.bf16.gmra.mxu0 %v480
    %v689 = vpop.f32.mrf.mxu0
    %v690 = vadd.f32 %v488, %v689
    %v691 = vpop.f32.mrf.mxu0
    %v692 = vadd.f32 %v492, %v691
    %v693 = vpop.f32.mrf.mxu0
    %v694 = vpop.f32.mrf.mxu0
    %695 = vdwg.mxu0
    %s696 = scalar_lea.vmem %s6, 4
    %v697 = vld [vmem:[%s696] ss:$8 sm:$0x3]
    %s698 = scalar_lea.vmem %s6, 5
    %v699 = vld [vmem:[%s698] ss:$8 sm:$0x3]
    %v700 = vadd.f32 %v690, %v692
    %701 = vadd.xlane.f32.xlu0 %v700
    %v702 = vpop.xlane.xlu0 %701
    %v703 = vmul.f32 %v690, %v690
    %v704 = vmul.f32 %v692, %v692
    %v705 = vadd.f32 %v703, %v704
    %706 = vadd.xlane.f32.xlu0 %v705
    %v707 = vpop.xlane.xlu0 %706
    %v708 = vmul.f32 %v702, 0.00390625
    %v709 = vmul.f32 %v707, 0.00390625
    %v710 = vmul.f32 %v708, %v708
    %v711 = vsub.f32 %v709, %v710
    %v712 = vsub.f32 %v690, %v708
    %v713 = vsub.f32 %v692, %v708
    %v714 = vadd.f32 %v711, 1e-05
    %v715 = vrsqrt.pop %v714
    %v716 = vmul.f32 %v712, %v715
    %v717 = vmul.f32 %v713, %v715
    %v719 = vlaneseq
    %v720 = vshrl.u32 %v719, 7
    %v721 = vsub.s32 0, %v720
    %v722 = vrot.slane %v697, %v721
    %v723 = vlaneseq
    %v724 = vshrl.u32 %v723, 7
    %v725 = vsub.s32 1, %v724
    %v726 = vrot.slane %v697, %v725
    %v729 = vmul.f32 %v716, %v722
    %v730 = vmul.f32 %v717, %v726
    %v732 = vlaneseq
    %v733 = vshrl.u32 %v732, 7
    %v734 = vsub.s32 0, %v733
    %v735 = vrot.slane %v699, %v734
    %v736 = vlaneseq
    %v737 = vshrl.u32 %v736, 7
    %v738 = vsub.s32 1, %v737
    %v739 = vrot.slane %v699, %v738
    %v742 = vadd.f32 %v729, %v735
    %v743 = vadd.f32 %v730, %v739
    %v744 = vtanh.pop %v742
    %v745 = vtanh.pop %v743
    %v746 = vld [vmem:[#allocation5] sm:$0xff]
    %v747 = vld [vmem:[#allocation5 + $0x8] sm:$0xff]
    %v748 = vld [vmem:[#allocation5 + $0x10] sm:$0xff]
    %v749 = vld [vmem:[#allocation5 + $0x18] sm:$0xff]
    %v750 = vld [vmem:[#allocation5 + $0x20] sm:$0xff]
    %v751 = vld [vmem:[#allocation5 + $0x28] sm:$0xff]
    %v752 = vld [vmem:[#allocation5 + $0x30] sm:$0xff]
    %v753 = vld [vmem:[#allocation5 + $0x38] sm:$0xff]
    %v754 = vld [vmem:[#allocation5 + $0x40] sm:$0xff]
    %v755 = vld [vmem:[#allocation5 + $0x48] sm:$0xff]
    %v756 = vld [vmem:[#allocation5 + $0x50] sm:$0xff]
    %v757 = vld [vmem:[#allocation5 + $0x58] sm:$0xff]
    %v758 = vld [vmem:[#allocation5 + $0x60] sm:$0xff]
    %v759 = vld [vmem:[#allocation5 + $0x68] sm:$0xff]
    %v760 = vld [vmem:[#allocation5 + $0x70] sm:$0xff]
    %v761 = vld [vmem:[#allocation5 + $0x78] sm:$0xff]
    %v762 = vld [vmem:[#allocation5 + $0x80] sm:$0xff]
    %v763 = vld [vmem:[#allocation5 + $0x88] sm:$0xff]
    %v764 = vld [vmem:[#allocation5 + $0x90] sm:$0xff]
    %v765 = vld [vmem:[#allocation5 + $0x98] sm:$0xff]
    %v766 = vld [vmem:[#allocation5 + $0xa0] sm:$0xff]
    %v767 = vld [vmem:[#allocation5 + $0xa8] sm:$0xff]
    %v768 = vld [vmem:[#allocation5 + $0xb0] sm:$0xff]
    %v769 = vld [vmem:[#allocation5 + $0xb8] sm:$0xff]
    %v770 = vld [vmem:[#allocation5 + $0xc0] sm:$0xff]
    %v771 = vld [vmem:[#allocation5 + $0xc8] sm:$0xff]
    %v772 = vld [vmem:[#allocation5 + $0xd0] sm:$0xff]
    %v773 = vld [vmem:[#allocation5 + $0xd8] sm:$0xff]
    %v774 = vld [vmem:[#allocation5 + $0xe0] sm:$0xff]
    %v775 = vld [vmem:[#allocation5 + $0xe8] sm:$0xff]
    %v776 = vld [vmem:[#allocation5 + $0xf0] sm:$0xff]
    %v777 = vld [vmem:[#allocation5 + $0xf8] sm:$0xff]
    %v778 = vpack.c.bf16 %v744, %v744
    %v779 = vpack.c.bf16 %v745, %v745
    %s780 = scalar_lea.vmem %s6, 6
    %v781 = vld [vmem:[%s780] ss:$8 sm:$0x3]
    %v783 = vlaneseq
    %v784 = vshrl.u32 %v783, 7
    %v785 = vsub.s32 0, %v784
    %v786 = vrot.slane %v781, %v785
    %v787 = vlaneseq
    %v788 = vshrl.u32 %v787, 7
    %v789 = vsub.s32 1, %v788
    %v790 = vrot.slane %v781, %v789
    %v825 = vunpack.c.l.b16 %v746
    %v826 = vunpack.c.h.b16 %v746
    %v827 = vunpack.c.l.b16 %v747
    %v828 = vunpack.c.h.b16 %v747
    %v829 = vunpack.c.l.b16 %v748
    %v830 = vunpack.c.h.b16 %v748
    %v831 = vunpack.c.l.b16 %v749
    %v832 = vunpack.c.h.b16 %v749
    %v833 = vunpack.c.l.b16 %v750
    %v834 = vunpack.c.h.b16 %v750
    %v835 = vunpack.c.l.b16 %v751
    %v836 = vunpack.c.h.b16 %v751
    %v837 = vunpack.c.l.b16 %v752
    %v838 = vunpack.c.h.b16 %v752
    %v839 = vunpack.c.l.b16 %v753
    %v840 = vunpack.c.h.b16 %v753
    %v841 = vunpack.c.l.b16 %v754
    %v842 = vunpack.c.h.b16 %v754
    %v843 = vunpack.c.l.b16 %v755
    %v844 = vunpack.c.h.b16 %v755
    %v845 = vunpack.c.l.b16 %v756
    %v846 = vunpack.c.h.b16 %v756
    %v847 = vunpack.c.l.b16 %v757
    %v848 = vunpack.c.h.b16 %v757
    %v849 = vunpack.c.l.b16 %v758
    %v850 = vunpack.c.h.b16 %v758
    %v851 = vunpack.c.l.b16 %v759
    %v852 = vunpack.c.h.b16 %v759
    %v853 = vunpack.c.l.b16 %v760
    %v854 = vunpack.c.h.b16 %v760
    %v855 = vunpack.c.l.b16 %v761
    %v856 = vunpack.c.h.b16 %v761
    %v857 = vunpack.c.l.b16 %v762
    %v858 = vunpack.c.h.b16 %v762
    %v859 = vunpack.c.l.b16 %v763
    %v860 = vunpack.c.h.b16 %v763
    %v861 = vunpack.c.l.b16 %v764
    %v862 = vunpack.c.h.b16 %v764
    %v863 = vunpack.c.l.b16 %v765
    %v864 = vunpack.c.h.b16 %v765
    %v865 = vunpack.c.l.b16 %v766
    %v866 = vunpack.c.h.b16 %v766
    %v867 = vunpack.c.l.b16 %v767
    %v868 = vunpack.c.h.b16 %v767
    %v869 = vunpack.c.l.b16 %v768
    %v870 = vunpack.c.h.b16 %v768
    %v871 = vunpack.c.l.b16 %v769
    %v872 = vunpack.c.h.b16 %v769
    %v873 = vunpack.c.l.b16 %v770
    %v874 = vunpack.c.h.b16 %v770
    %v875 = vunpack.c.l.b16 %v771
    %v876 = vunpack.c.h.b16 %v771
    %v877 = vunpack.c.l.b16 %v772
    %v878 = vunpack.c.h.b16 %v772
    %v879 = vunpack.c.l.b16 %v773
    %v880 = vunpack.c.h.b16 %v773
    %v881 = vunpack.c.l.b16 %v774
    %v882 = vunpack.c.h.b16 %v774
    %v883 = vunpack.c.l.b16 %v775
    %v884 = vunpack.c.h.b16 %v775
    %v885 = vunpack.c.l.b16 %v776
    %v886 = vunpack.c.h.b16 %v776
    %v887 = vunpack.c.l.b16 %v777
    %v888 = vunpack.c.h.b16 %v777
    %v889 = vpack.c.b16 %v827, %v825
    %v890 = vpack.c.b16 %v828, %v826
    %v891 = vpack.c.b16 %v831, %v829
    %v892 = vpack.c.b16 %v832, %v830
    %v893 = vpack.c.b16 %v835, %v833
    %v894 = vpack.c.b16 %v836, %v834
    %v895 = vpack.c.b16 %v839, %v837
    %v896 = vpack.c.b16 %v840, %v838
    %v897 = vpack.c.b16 %v843, %v841
    %v898 = vpack.c.b16 %v844, %v842
    %v899 = vpack.c.b16 %v847, %v845
    %v900 = vpack.c.b16 %v848, %v846
    %v901 = vpack.c.b16 %v851, %v849
    %v902 = vpack.c.b16 %v852, %v850
    %v903 = vpack.c.b16 %v855, %v853
    %v904 = vpack.c.b16 %v856, %v854
    %v905 = vpack.c.b16 %v859, %v857
    %v906 = vpack.c.b16 %v860, %v858
    %v907 = vpack.c.b16 %v863, %v861
    %v908 = vpack.c.b16 %v864, %v862
    %v909 = vpack.c.b16 %v867, %v865
    %v910 = vpack.c.b16 %v868, %v866
    %v911 = vpack.c.b16 %v871, %v869
    %v912 = vpack.c.b16 %v872, %v870
    %v913 = vpack.c.b16 %v875, %v873
    %v914 = vpack.c.b16 %v876, %v874
    %v915 = vpack.c.b16 %v879, %v877
    %v916 = vpack.c.b16 %v880, %v878
    %v917 = vpack.c.b16 %v883, %v881
    %v918 = vpack.c.b16 %v884, %v882
    %v919 = vpack.c.b16 %v887, %v885
    %v920 = vpack.c.b16 %v888, %v886
    %953 = vmatprep.subr.bf16.mxu0 %v904
    %954 = vmatpush1.bf16.msra.mxu0 %v903
    %955 = vmatprep.subr.bf16.mxu0 %v902
    %956 = vmatpush1.bf16.msra.mxu0 %v901
    %957 = vmatprep.subr.bf16.mxu0 %v900
    %958 = vmatpush1.bf16.msra.mxu0 %v899
    %959 = vmatprep.subr.bf16.mxu0 %v898
    %960 = vmatpush1.bf16.msra.mxu0 %v897
    %961 = vmatprep.subr.bf16.mxu0 %v896
    %962 = vmatpush1.bf16.msra.mxu0 %v895
    %963 = vmatprep.subr.bf16.mxu0 %v894
    %964 = vmatpush1.bf16.msra.mxu0 %v893
    %965 = vmatprep.subr.bf16.mxu0 %v892
    %966 = vmatpush1.bf16.msra.mxu0 %v891
    %967 = vmatprep.subr.bf16.mxu0 %v890
    %968 = vmatpush1.bf16.msra.mxu0 %v889
    %969 = vmatprep.subr.bf16.mxu0 %v920
    %970 = vmatpush2.bf16.msra.mxu0 %v919
    %971 = vmatprep.subr.bf16.mxu0 %v918
    %972 = vmatpush2.bf16.msra.mxu0 %v917
    %973 = vmatprep.subr.bf16.mxu0 %v916
    %974 = vmatpush2.bf16.msra.mxu0 %v915
    %975 = vmatprep.subr.bf16.mxu0 %v914
    %976 = vmatpush2.bf16.msra.mxu0 %v913
    %977 = vmatprep.subr.bf16.mxu0 %v912
    %978 = vmatpush2.bf16.msra.mxu0 %v911
    %979 = vmatprep.subr.bf16.mxu0 %v910
    %980 = vmatpush2.bf16.msra.mxu0 %v909
    %981 = vmatprep.subr.bf16.mxu0 %v908
    %982 = vmatpush2.bf16.msra.mxu0 %v907
    %983 = vmatprep.subr.bf16.mxu0 %v906
    %984 = vmatpush2.bf16.msra.mxu0 %v905
    %985 = vmatprep.mubr.bf16.mxu0 %v779
    %986 = vmatmul.mubr.bf16.gmra.mxu0 %v778
    %v987 = vpop.f32.mrf.mxu0
    %v988 = vadd.f32 %v786, %v987
    %v989 = vpop.f32.mrf.mxu0
    %v990 = vadd.f32 %v790, %v989
    %v991 = vpop.f32.mrf.mxu0
    %v992 = vpop.f32.mrf.mxu0
    %993 = vdwg.mxu0
    %s994 = scalar_lea.vmem %s6, 7
    %v995 = vld [vmem:[%s994] ss:$8 sm:$0x3]
    %s996 = scalar_lea.vmem %s6, 16
    %v997 = vld [vmem:[%s996] ss:$8 sm:$0x3]
    %v998 = vadd.f32 %v988, %v990
    %999 = vadd.xlane.f32.xlu0 %v998
    %v1000 = vpop.xlane.xlu0 %999
    %v1001 = vmul.f32 %v988, %v988
    %v1002 = vmul.f32 %v990, %v990
    %v1003 = vadd.f32 %v1001, %v1002
    %1004 = vadd.xlane.f32.xlu0 %v1003
    %v1005 = vpop.xlane.xlu0 %1004
    %v1006 = vmul.f32 %v1000, 0.00390625
    %v1007 = vmul.f32 %v1005, 0.00390625
    %v1008 = vmul.f32 %v1006, %v1006
    %v1009 = vsub.f32 %v1007, %v1008
    %v1010 = vsub.f32 %v988, %v1006
    %v1011 = vsub.f32 %v990, %v1006
    %v1012 = vadd.f32 %v1009, 1e-05
    %v1013 = vrsqrt.pop %v1012
    %v1014 = vmul.f32 %v1010, %v1013
    %v1015 = vmul.f32 %v1011, %v1013
    %v1017 = vlaneseq
    %v1018 = vshrl.u32 %v1017, 7
    %v1019 = vsub.s32 0, %v1018
    %v1020 = vrot.slane %v995, %v1019
    %v1021 = vlaneseq
    %v1022 = vshrl.u32 %v1021, 7
    %v1023 = vsub.s32 1, %v1022
    %v1024 = vrot.slane %v995, %v1023
    %v1027 = vmul.f32 %v1014, %v1020
    %v1028 = vmul.f32 %v1015, %v1024
    %v1030 = vlaneseq
    %v1031 = vshrl.u32 %v1030, 7
    %v1032 = vsub.s32 0, %v1031
    %v1033 = vrot.slane %v997, %v1032
    %v1034 = vlaneseq
    %v1035 = vshrl.u32 %v1034, 7
    %v1036 = vsub.s32 1, %v1035
    %v1037 = vrot.slane %v997, %v1036
    %v1040 = vadd.f32 %v1027, %v1033
    %v1041 = vadd.f32 %v1028, %v1037
    %v1042 = vtanh.pop %v1040
    %v1043 = vtanh.pop %v1041
    %v1044 = vld [vmem:[#allocation7] sm:$0xff]
    %v1045 = vld [vmem:[#allocation7 + $0x8] sm:$0xff]
    %v1046 = vld [vmem:[#allocation7 + $0x10] sm:$0xff]
    %v1047 = vld [vmem:[#allocation7 + $0x18] sm:$0xff]
    %v1048 = vld [vmem:[#allocation7 + $0x20] sm:$0xff]
    %v1049 = vld [vmem:[#allocation7 + $0x28] sm:$0xff]
    %v1050 = vld [vmem:[#allocation7 + $0x30] sm:$0xff]
    %v1051 = vld [vmem:[#allocation7 + $0x38] sm:$0xff]
    %v1052 = vld [vmem:[#allocation7 + $0x40] sm:$0xff]
    %v1053 = vld [vmem:[#allocation7 + $0x48] sm:$0xff]
    %v1054 = vld [vmem:[#allocation7 + $0x50] sm:$0xff]
    %v1055 = vld [vmem:[#allocation7 + $0x58] sm:$0xff]
    %v1056 = vld [vmem:[#allocation7 + $0x60] sm:$0xff]
    %v1057 = vld [vmem:[#allocation7 + $0x68] sm:$0xff]
    %v1058 = vld [vmem:[#allocation7 + $0x70] sm:$0xff]
    %v1059 = vld [vmem:[#allocation7 + $0x78] sm:$0xff]
    %v1060 = vld [vmem:[#allocation7 + $0x80] sm:$0xff]
    %v1061 = vld [vmem:[#allocation7 + $0x88] sm:$0xff]
    %v1062 = vld [vmem:[#allocation7 + $0x90] sm:$0xff]
    %v1063 = vld [vmem:[#allocation7 + $0x98] sm:$0xff]
    %v1064 = vld [vmem:[#allocation7 + $0xa0] sm:$0xff]
    %v1065 = vld [vmem:[#allocation7 + $0xa8] sm:$0xff]
    %v1066 = vld [vmem:[#allocation7 + $0xb0] sm:$0xff]
    %v1067 = vld [vmem:[#allocation7 + $0xb8] sm:$0xff]
    %v1068 = vld [vmem:[#allocation7 + $0xc0] sm:$0xff]
    %v1069 = vld [vmem:[#allocation7 + $0xc8] sm:$0xff]
    %v1070 = vld [vmem:[#allocation7 + $0xd0] sm:$0xff]
    %v1071 = vld [vmem:[#allocation7 + $0xd8] sm:$0xff]
    %v1072 = vld [vmem:[#allocation7 + $0xe0] sm:$0xff]
    %v1073 = vld [vmem:[#allocation7 + $0xe8] sm:$0xff]
    %v1074 = vld [vmem:[#allocation7 + $0xf0] sm:$0xff]
    %v1075 = vld [vmem:[#allocation7 + $0xf8] sm:$0xff]
    %v1076 = vpack.c.bf16 %v1042, %v1042
    %v1077 = vpack.c.bf16 %v1043, %v1043
    %s1078 = scalar_lea.vmem %s6, 17
    %v1079 = vld [vmem:[%s1078] ss:$8 sm:$0x3]
    %v1081 = vlaneseq
    %v1082 = vshrl.u32 %v1081, 7
    %v1083 = vsub.s32 0, %v1082
    %v1084 = vrot.slane %v1079, %v1083
    %v1085 = vlaneseq
    %v1086 = vshrl.u32 %v1085, 7
    %v1087 = vsub.s32 1, %v1086
    %v1088 = vrot.slane %v1079, %v1087
    %v1123 = vunpack.c.l.b16 %v1044
    %v1124 = vunpack.c.h.b16 %v1044
    %v1125 = vunpack.c.l.b16 %v1045
    %v1126 = vunpack.c.h.b16 %v1045
    %v1127 = vunpack.c.l.b16 %v1046
    %v1128 = vunpack.c.h.b16 %v1046
    %v1129 = vunpack.c.l.b16 %v1047
    %v1130 = vunpack.c.h.b16 %v1047
    %v1131 = vunpack.c.l.b16 %v1048
    %v1132 = vunpack.c.h.b16 %v1048
    %v1133 = vunpack.c.l.b16 %v1049
    %v1134 = vunpack.c.h.b16 %v1049
    %v1135 = vunpack.c.l.b16 %v1050
    %v1136 = vunpack.c.h.b16 %v1050
    %v1137 = vunpack.c.l.b16 %v1051
    %v1138 = vunpack.c.h.b16 %v1051
    %v1139 = vunpack.c.l.b16 %v1052
    %v1140 = vunpack.c.h.b16 %v1052
    %v1141 = vunpack.c.l.b16 %v1053
    %v1142 = vunpack.c.h.b16 %v1053
    %v1143 = vunpack.c.l.b16 %v1054
    %v1144 = vunpack.c.h.b16 %v1054
    %v1145 = vunpack.c.l.b16 %v1055
    %v1146 = vunpack.c.h.b16 %v1055
    %v1147 = vunpack.c.l.b16 %v1056
    %v1148 = vunpack.c.h.b16 %v1056
    %v1149 = vunpack.c.l.b16 %v1057
    %v1150 = vunpack.c.h.b16 %v1057
    %v1151 = vunpack.c.l.b16 %v1058
    %v1152 = vunpack.c.h.b16 %v1058
    %v1153 = vunpack.c.l.b16 %v1059
    %v1154 = vunpack.c.h.b16 %v1059
    %v1155 = vunpack.c.l.b16 %v1060
    %v1156 = vunpack.c.h.b16 %v1060
    %v1157 = vunpack.c.l.b16 %v1061
    %v1158 = vunpack.c.h.b16 %v1061
    %v1159 = vunpack.c.l.b16 %v1062
    %v1160 = vunpack.c.h.b16 %v1062
    %v1161 = vunpack.c.l.b16 %v1063
    %v1162 = vunpack.c.h.b16 %v1063
    %v1163 = vunpack.c.l.b16 %v1064
    %v1164 = vunpack.c.h.b16 %v1064
    %v1165 = vunpack.c.l.b16 %v1065
    %v1166 = vunpack.c.h.b16 %v1065
    %v1167 = vunpack.c.l.b16 %v1066
    %v1168 = vunpack.c.h.b16 %v1066
    %v1169 = vunpack.c.l.b16 %v1067
    %v1170 = vunpack.c.h.b16 %v1067
    %v1171 = vunpack.c.l.b16 %v1068
    %v1172 = vunpack.c.h.b16 %v1068
    %v1173 = vunpack.c.l.b16 %v1069
    %v1174 = vunpack.c.h.b16 %v1069
    %v1175 = vunpack.c.l.b16 %v1070
    %v1176 = vunpack.c.h.b16 %v1070
    %v1177 = vunpack.c.l.b16 %v1071
    %v1178 = vunpack.c.h.b16 %v1071
    %v1179 = vunpack.c.l.b16 %v1072
    %v1180 = vunpack.c.h.b16 %v1072
    %v1181 = vunpack.c.l.b16 %v1073
    %v1182 = vunpack.c.h.b16 %v1073
    %v1183 = vunpack.c.l.b16 %v1074
    %v1184 = vunpack.c.h.b16 %v1074
    %v1185 = vunpack.c.l.b16 %v1075
    %v1186 = vunpack.c.h.b16 %v1075
    %v1187 = vpack.c.b16 %v1125, %v1123
    %v1188 = vpack.c.b16 %v1126, %v1124
    %v1189 = vpack.c.b16 %v1129, %v1127
    %v1190 = vpack.c.b16 %v1130, %v1128
    %v1191 = vpack.c.b16 %v1133, %v1131
    %v1192 = vpack.c.b16 %v1134, %v1132
    %v1193 = vpack.c.b16 %v1137, %v1135
    %v1194 = vpack.c.b16 %v1138, %v1136
    %v1195 = vpack.c.b16 %v1141, %v1139
    %v1196 = vpack.c.b16 %v1142, %v1140
    %v1197 = vpack.c.b16 %v1145, %v1143
    %v1198 = vpack.c.b16 %v1146, %v1144
    %v1199 = vpack.c.b16 %v1149, %v1147
    %v1200 = vpack.c.b16 %v1150, %v1148
    %v1201 = vpack.c.b16 %v1153, %v1151
    %v1202 = vpack.c.b16 %v1154, %v1152
    %v1203 = vpack.c.b16 %v1157, %v1155
    %v1204 = vpack.c.b16 %v1158, %v1156
    %v1205 = vpack.c.b16 %v1161, %v1159
    %v1206 = vpack.c.b16 %v1162, %v1160
    %v1207 = vpack.c.b16 %v1165, %v1163
    %v1208 = vpack.c.b16 %v1166, %v1164
    %v1209 = vpack.c.b16 %v1169, %v1167
    %v1210 = vpack.c.b16 %v1170, %v1168
    %v1211 = vpack.c.b16 %v1173, %v1171
    %v1212 = vpack.c.b16 %v1174, %v1172
    %v1213 = vpack.c.b16 %v1177, %v1175
    %v1214 = vpack.c.b16 %v1178, %v1176
    %v1215 = vpack.c.b16 %v1181, %v1179
    %v1216 = vpack.c.b16 %v1182, %v1180
    %v1217 = vpack.c.b16 %v1185, %v1183
    %v1218 = vpack.c.b16 %v1186, %v1184
    %1251 = vmatprep.subr.bf16.mxu0 %v1202
    %1252 = vmatpush1.bf16.msra.mxu0 %v1201
    %1253 = vmatprep.subr.bf16.mxu0 %v1200
    %1254 = vmatpush1.bf16.msra.mxu0 %v1199
    %1255 = vmatprep.subr.bf16.mxu0 %v1198
    %1256 = vmatpush1.bf16.msra.mxu0 %v1197
    %1257 = vmatprep.subr.bf16.mxu0 %v1196
    %1258 = vmatpush1.bf16.msra.mxu0 %v1195
    %1259 = vmatprep.subr.bf16.mxu0 %v1194
    %1260 = vmatpush1.bf16.msra.mxu0 %v1193
    %1261 = vmatprep.subr.bf16.mxu0 %v1192
    %1262 = vmatpush1.bf16.msra.mxu0 %v1191
    %1263 = vmatprep.subr.bf16.mxu0 %v1190
    %1264 = vmatpush1.bf16.msra.mxu0 %v1189
    %1265 = vmatprep.subr.bf16.mxu0 %v1188
    %1266 = vmatpush1.bf16.msra.mxu0 %v1187
    %1267 = vmatprep.subr.bf16.mxu0 %v1218
    %1268 = vmatpush2.bf16.msra.mxu0 %v1217
    %1269 = vmatprep.subr.bf16.mxu0 %v1216
    %1270 = vmatpush2.bf16.msra.mxu0 %v1215
    %1271 = vmatprep.subr.bf16.mxu0 %v1214
    %1272 = vmatpush2.bf16.msra.mxu0 %v1213
    %1273 = vmatprep.subr.bf16.mxu0 %v1212
    %1274 = vmatpush2.bf16.msra.mxu0 %v1211
    %1275 = vmatprep.subr.bf16.mxu0 %v1210
    %1276 = vmatpush2.bf16.msra.mxu0 %v1209
    %1277 = vmatprep.subr.bf16.mxu0 %v1208
    %1278 = vmatpush2.bf16.msra.mxu0 %v1207
    %1279 = vmatprep.subr.bf16.mxu0 %v1206
    %1280 = vmatpush2.bf16.msra.mxu0 %v1205
    %1281 = vmatprep.subr.bf16.mxu0 %v1204
    %1282 = vmatpush2.bf16.msra.mxu0 %v1203
    %1283 = vmatprep.mubr.bf16.mxu0 %v1077
    %1284 = vmatmul.mubr.bf16.gmra.mxu0 %v1076
    %v1285 = vpop.f32.mrf.mxu0
    %v1286 = vadd.f32 %v1084, %v1285
    %v1287 = vpop.f32.mrf.mxu0
    %v1288 = vadd.f32 %v1088, %v1287
    %v1289 = vpop.f32.mrf.mxu0
    %v1290 = vpop.f32.mrf.mxu0
    %1291 = vdwg.mxu0
    %1292 = vst [vmem:[#allocation8] sm:$0xff] %v1286
    %1293 = vst [vmem:[#allocation8 + $0x8] sm:$0xff] %v1288
    %v1294 = vld [vmem:[%s7] sm:$0xff]
    %v1295 = vld [vmem:[%s7 + $0x8] sm:$0xff]
    %v1296 = vsub.f32 %v1286, %v1294
    %v1297 = vsub.f32 %v1288, %v1295
    %v1298 = vmul.f32 %v1296, %v1296
    %v1299 = vmul.f32 %v1297, %v1297
    %v1300 = vadd.f32 %v1298, %v1299
    %1301 = vadd.xlane.f32.xlu0 %v1300
    %v1302 = vpop.xlane.xlu0 %1301
    %v1303 = vrot.slane %v1302, 4
    %v1304 = vadd.f32 %v1302, %v1303
    %v1305 = vrot.slane %v1304, 2
    %v1306 = vadd.f32 %v1304, %v1305
    %v1307 = vrot.slane %v1306, 1
    %v1308 = vadd.f32 %v1306, %v1307
    %s1309 = vtos %v1308
    %v1310 = vstv %s1309
    %v1311 = vmul.f32 %v1310, 0.000625
    %vm1312 = vcmask 0
    %1313 = vst.msk [vmem:[#allocation9] sm:$0x1] %vm1312, %v1311
    // Predicated region
    $region46: #{convmorph_oreo_forward.1} parent=1 // pred_check
      _
    $region47: #{convmorph_oreo_forward.1} parent=1 // pred_check_branch
      %1315 = sbr.rel (0) target = $region49
    $region48: #{convmorph_oreo_forward.1} parent=1 // pred_region
      %s1317 = ssub.s32 256, 256
      %1318 = vsyncadd [#allocation4], %s1317
      %s1320 = sshll.u32 [#allocation8], 4
      %s1321 = int_to_ptr.vmem [resolvable:$true] %s1320
      %1323 = dma.vmem_to_hbm [thread:$0]  %s1321, 256, %s8, [#allocation4]
    $region49: #{convmorph_oreo_forward.1} parent=1 // pred_fallthru
      _
    // Predicated region
    $region50: #{convmorph_oreo_forward.1} parent=1 // pred_check
      _
    $region51: #{convmorph_oreo_forward.1} parent=1 // pred_check_branch
      %1325 = sbr.rel (0) target = $region53
    $region52: #{convmorph_oreo_forward.1} parent=1 // pred_region
      %s1327 = ssub.s32 16, 16
      %1328 = vsyncadd [#allocation10], %s1327
      %s1330 = sshll.u32 [#allocation9], 4
      %s1331 = int_to_ptr.vmem [resolvable:$true] %s1330
      %1333 = dma.vmem_to_hbm [thread:$0]  %s1331, 16, %s9, [#allocation10]
    $region53: #{convmorph_oreo_forward.1} parent=1 // pred_fallthru
      _
    // Predicated region
    $region54: #{convmorph_oreo_forward.1} parent=1 // pred_check
      _
    $region55: #{convmorph_oreo_forward.1} parent=1 // pred_check_branch
      %1335 = sbr.rel (0) target = $region57
    $region56: #{convmorph_oreo_forward.1} parent=1 // pred_region
      %1336 = dma.done [#allocation4], 256
    $region57: #{convmorph_oreo_forward.1} parent=1 // pred_fallthru
      _
    // Predicated region
    $region58: #{convmorph_oreo_forward.1} parent=1 // pred_check
      _
    $region59: #{convmorph_oreo_forward.1} parent=1 // pred_check_branch
      %1338 = sbr.rel (0) target = $region61
    $region60: #{convmorph_oreo_forward.1} parent=1 // pred_region
      %1339 = dma.done [#allocation10], 16
    $region61: #{convmorph_oreo_forward.1} parent=1 // pred_fallthru
      _
    %1340 = vsyncpa [#allocation3], 1
    %1341 = vsyncpa [#allocation6], 1
    %1342 = vsyncpa [#allocation4], 1
    %1343 = vsyncpa [#allocation10], 1

</llo_original>
